<compile_context>
chip_gen: v6e
topology: v6e:2x2x1
jax: 0.10.0
libtpu: 0.0.40
codegen_flags: <defaults>
</compile_context>

<pallas_src>
from functools import partial

import jax
import jax.numpy as jnp
from jax import lax
from jax.experimental import pallas as pl
from jax.experimental.pallas import tpu as pltpu


def _spconv_kernel(x_ref, bw_ref, b_ref, o_ref, xp_ref, *, H, Hin, KH, ph):
    """One batch element per grid step.

    x_ref : (1, Hin, Win*Cin)   unpadded input rows, channels fastest within a row
    bw_ref: (KH, Win*Cin, W*Cr) row-banded weights (KW taps + W-padding folded in)
    b_ref : (1, W*Cr)           bias tiled across the W positions
    o_ref : (1, H, W*Cr)        conv output, lane-dense (W*Cr = 128 here)
    xp_ref: (Hp, Win*Cin) f32   VMEM scratch holding the H-zero-padded row slab
    """
    w_cr = o_ref.shape[-1]
    k_cin = x_ref.shape[-1]

    # Fused ConstantPad2d (H direction): zero only the pad rows (scratch persists across
    # grid steps, but pad rows must be re-zeroed unconditionally — with "parallel"
    # semantics a given core may never see program_id==0), then drop the valid rows in.
    # W-direction padding is folded into the banded weights, so no lane-offset writes.
    zero_rows = jnp.zeros((ph, k_cin), jnp.float32)
    xp_ref[0:ph, :] = zero_rows
    xp_ref[ph + Hin:, :] = zero_rows
    xp_ref[ph:ph + Hin, :] = x_ref[0].astype(jnp.float32)

    # KH matmuls, statically unrolled: each is (H, Win*Cin) @ (Win*Cin, W*Cr) on the MXU,
    # accumulated in f32.
    acc = jnp.zeros((H, w_cr), jnp.float32)
    for dh in range(KH):
        acc = acc + jnp.dot(
            xp_ref[dh:dh + H, :], bw_ref[dh], preferred_element_type=jnp.float32
        )

    # Bias added once, cast once, one full-width lane-dense store.
    o_ref[0] = (acc + b_ref[...]).astype(o_ref.dtype)


def _banded_weight(weight_hwio, kh, kw, cin, cr, win, w, pw):
    """Fold the KW taps and the left/right zero padding into a banded RHS.

    Returns bw with bw[dh, wi*Cin + ci, wo*Cr + j] = W[dh, wi + pw - wo, ci, j]
    when 0 <= wi + pw - wo < KW, else 0.  Shape (KH, Win*Cin, W*Cr).
    """
    wi = jnp.arange(win)                                  # input column
    wo = jnp.arange(w)                                    # output column
    dw = wi[:, None] + pw - wo[None, :]                   # (Win, W) tap index
    valid = (dw >= 0) & (dw < kw)
    gathered = weight_hwio[:, jnp.clip(dw, 0, kw - 1), :, :]      # (KH, Win, W, Cin, Cr)
    gathered = jnp.where(valid[None, :, :, None, None], gathered, 0.0)
    bw = jnp.transpose(gathered, (0, 1, 3, 2, 4))                 # (KH, Win, Cin, W, Cr)
    return bw.reshape(kh, win * cin, w * cr).astype(jnp.float32)


def sp_conv_transpose2d(x_nchw, weight_hwio, bias, kernel_size, r):
    """Forward pass of SPConvTranspose2d. Returns NCHW output (B, Cout, H, W*r)."""
    B, Cin, Hin, Win = x_nchw.shape
    kh, kw = kernel_size
    Cr = weight_hwio.shape[-1]
    Cout = Cr // r
    ph, pw = kh // 2, kw // 2
    Hp, Wp = Hin + 2 * ph, Win + 2 * pw
    H, W = Hp - kh + 1, Wp - kw + 1
    KCin = Win * Cin          # 64  : lane width of the input row slab
    WCr = W * Cr              # 128 : lane width of the output slab

    # ---- tiny wrapper-side prep (weight banding is per-call constant work) ----
    bw = _banded_weight(weight_hwio, kh, kw, Cin, Cr, Win, W, pw)
    brow = jnp.tile(bias, W).reshape(1, WCr).astype(jnp.float32)      # brow[w*Cr+j] = bias[j]
    x_rows = jnp.transpose(x_nchw, (0, 2, 3, 1)).reshape(B, Hin, KCin)

    conv_out = pl.pallas_call(
        partial(_spconv_kernel, H=H, Hin=Hin, KH=kh, ph=ph),
        out_shape=jax.ShapeDtypeStruct((B, H, WCr), x_nchw.dtype),
        grid_spec=pltpu.PrefetchScalarGridSpec(
            num_scalar_prefetch=0,
            grid=(B,),
            in_specs=[
                pl.BlockSpec((1, Hin, KCin), lambda b: (b, 0, 0)),
                pl.BlockSpec((kh, KCin, WCr), lambda b: (0, 0, 0)),   # weight stays resident
                pl.BlockSpec((1, WCr), lambda b: (0, 0)),
            ],
            out_specs=pl.BlockSpec((1, H, WCr), lambda b: (b, 0, 0)),
            scratch_shapes=[pltpu.VMEM((Hp, KCin), jnp.float32)],
        ),
        compiler_params=pltpu.CompilerParams(dimension_semantics=("parallel",)),
    )(x_rows, bw, brow)

    # Sub-pixel shuffle (pure layout, done in the wrapper): conv channel index = rr*Cout + c;
    #   out[b, c, h, w*r + rr] = conv[b, h, w*Cr + rr*Cout + c]
    out = conv_out.reshape(B, H, W, r, Cout)
    out = jnp.transpose(out, (0, 4, 1, 2, 3)).reshape(B, Cout, H, W * r)
    return out


def _reference(x_nchw, weight_hwio, bias, kernel_size, r):
    """Pure-JAX reference mirroring the PyTorch module."""
    kh, kw = kernel_size
    Cr = weight_hwio.shape[-1]
    Cout = Cr // r
    ph, pw = kh // 2, kw // 2
    x = jnp.transpose(x_nchw, (0, 2, 3, 1))
    xp = jnp.pad(x, ((0, 0), (ph, ph), (pw, pw), (0, 0)))
    conv = lax.conv_general_dilated(
        xp, weight_hwio, window_strides=(1, 1), padding="VALID",
        dimension_numbers=("NHWC", "HWIO", "NHWC"),
    ) + bias
    B_, H, W, _ = conv.shape
    out = conv.reshape(B_, H, W, r, Cout)
    return jnp.transpose(out, (0, 4, 1, 2, 3)).reshape(B_, Cout, H, W * r)


if __name__ == "__main__":
    # SPConvTranspose2d(in_channels=4, out_channels=4, kernel_size=(3,3), r=2)
    in_channels, out_channels, kernel_size, r = 4, 4, (3, 3), 2
    B, Hin, Win = 2, 16, 16

    key = jax.random.PRNGKey(0)
    kx, kw_key, kb_key = jax.random.split(key, 3)

    x = jax.random.normal(kx, (B, in_channels, Hin, Win), dtype=jnp.float32)
    # Conv2d weight (PyTorch shape (Cout*r, Cin, kh, kw)); created directly in HWIO.
    weight_hwio = 0.1 * jax.random.normal(
        kw_key, (kernel_size[0], kernel_size[1], in_channels, out_channels * r),
        dtype=jnp.float32,
    )
    bias = 0.1 * jax.random.normal(kb_key, (out_channels * r,), dtype=jnp.float32)

    fwd = jax.jit(sp_conv_transpose2d, static_argnums=(3, 4))
    out = fwd(x, weight_hwio, bias, kernel_size, r)
    out = jax.block_until_ready(out)

    ref = _reference(x, weight_hwio, bias, kernel_size, r)
    assert out.shape == (B, out_channels, Hin, Win * r), out.shape
    assert jnp.allclose(out, ref, atol=1e-5, rtol=1e-5), "mismatch vs reference"

    print("KERNEL_OK")
</pallas_src>

<mosaic_0001>
module attributes {stable_mosaic.version = 11 : i64} {
  func.func @_spconv_kernel(%arg0: i32, %arg1: memref<1x16x64xf32, #tpu.memory_space<vmem>>, %arg2: memref<3x64x128xf32, #tpu.memory_space<vmem>>, %arg3: memref<1x128xf32, #tpu.memory_space<vmem>>, %arg4: memref<1x16x128xf32, #tpu.memory_space<vmem>>, %arg5: memref<18x64xf32, #tpu.memory_space<vmem>>) attributes {dimension_semantics = [#tpu.dimension_semantics<parallel>], iteration_bounds = array<i64: 2>, scalar_prefetch = 0 : i64, scratch_operands = 1 : i64, tpu.core_type = #tpu.core_type<tc>, window_params = [{transform_indices = @transform_0, window_bounds = array<i64: 1, 16, 64>}, {pipeline_mode = #tpu.pipeline_mode<synchronous>, transform_indices = @transform_1, window_bounds = array<i64: 3, 64, 128>}, {pipeline_mode = #tpu.pipeline_mode<synchronous>, transform_indices = @transform_2, window_bounds = array<i64: 1, 128>}, {transform_indices = @transform_3, window_bounds = array<i64: 1, 16, 128>}]} {
    %cst = arith.constant 0.000000e+00 : f32
    %0 = vector.broadcast %cst : f32 to vector<1x64xf32>
    %c0 = arith.constant 0 : index
    %c0_0 = arith.constant 0 : index
    %1 = vector.load %arg5[%c0, %c0_0] : memref<18x64xf32, #tpu.memory_space<vmem>>, vector<1x64xf32>
    tpu.vector_store %arg5[%c0, %c0_0], %0 {strides = array<i32>} : memref<18x64xf32, #tpu.memory_space<vmem>>, vector<1x64xf32>,
    %c17 = arith.constant 17 : index
    %c0_1 = arith.constant 0 : index
    %2 = vector.load %arg5[%c17, %c0_1] : memref<18x64xf32, #tpu.memory_space<vmem>>, vector<1x64xf32>
    tpu.vector_store %arg5[%c17, %c0_1], %0 {strides = array<i32>} : memref<18x64xf32, #tpu.memory_space<vmem>>, vector<1x64xf32>,
    %c0_2 = arith.constant 0 : index
    %c0_3 = arith.constant 0 : index
    %c0_4 = arith.constant 0 : index
    %3 = vector.load %arg1[%c0_2, %c0_3, %c0_4] : memref<1x16x64xf32, #tpu.memory_space<vmem>>, vector<1x16x64xf32>
    %4 = vector.shape_cast %3 : vector<1x16x64xf32> to vector<16x64xf32>
    %c1 = arith.constant 1 : index
    %c0_5 = arith.constant 0 : index
    %5 = vector.load %arg5[%c1, %c0_5] : memref<18x64xf32, #tpu.memory_space<vmem>>, vector<16x64xf32>
    tpu.vector_store %arg5[%c1, %c0_5], %4 {strides = array<i32>} : memref<18x64xf32, #tpu.memory_space<vmem>>, vector<16x64xf32>,
    %cst_6 = arith.constant 0.000000e+00 : f32
    %6 = vector.broadcast %cst_6 : f32 to vector<16x128xf32>
    %c0_7 = arith.constant 0 : index
    %c0_8 = arith.constant 0 : index
    %7 = vector.load %arg5[%c0_7, %c0_8] : memref<18x64xf32, #tpu.memory_space<vmem>>, vector<16x64xf32>
    %c0_9 = arith.constant 0 : index
    %c0_10 = arith.constant 0 : index
    %c0_11 = arith.constant 0 : index
    %8 = vector.load %arg2[%c0_9, %c0_10, %c0_11] : memref<3x64x128xf32, #tpu.memory_space<vmem>>, vector<1x64x128xf32>
    %9 = vector.shape_cast %8 : vector<1x64x128xf32> to vector<64x128xf32>
    %cst_12 = arith.constant dense<0.000000e+00> : vector<16x128xf32>
    %10 = tpu.matmul %7, %9, %cst_12 {dimension_numbers = #tpu.dot_dimension_numbers<[1], [0], [0], [1], [0, 0, 1, 1], [], []>} : vector<16x64xf32>, vector<64x128xf32>, vector<16x128xf32> -> vector<16x128xf32>
    %11 = arith.addf %6, %10 : vector<16x128xf32>
    %c1_13 = arith.constant 1 : index
    %c0_14 = arith.constant 0 : index
    %12 = vector.load %arg5[%c1_13, %c0_14] : memref<18x64xf32, #tpu.memory_space<vmem>>, vector<16x64xf32>
    %c1_15 = arith.constant 1 : index
    %c0_16 = arith.constant 0 : index
    %c0_17 = arith.constant 0 : index
    %13 = vector.load %arg2[%c1_15, %c0_16, %c0_17] : memref<3x64x128xf32, #tpu.memory_space<vmem>>, vector<1x64x128xf32>
    %14 = vector.shape_cast %13 : vector<1x64x128xf32> to vector<64x128xf32>
    %cst_18 = arith.constant dense<0.000000e+00> : vector<16x128xf32>
    %15 = tpu.matmul %12, %14, %cst_18 {dimension_numbers = #tpu.dot_dimension_numbers<[1], [0], [0], [1], [0, 0, 1, 1], [], []>} : vector<16x64xf32>, vector<64x128xf32>, vector<16x128xf32> -> vector<16x128xf32>
    %16 = arith.addf %11, %15 : vector<16x128xf32>
    %c2 = arith.constant 2 : index
    %c0_19 = arith.constant 0 : index
    %17 = vector.load %arg5[%c2, %c0_19] : memref<18x64xf32, #tpu.memory_space<vmem>>, vector<16x64xf32>
    %c2_20 = arith.constant 2 : index
    %c0_21 = arith.constant 0 : index
    %c0_22 = arith.constant 0 : index
    %18 = vector.load %arg2[%c2_20, %c0_21, %c0_22] : memref<3x64x128xf32, #tpu.memory_space<vmem>>, vector<1x64x128xf32>
    %19 = vector.shape_cast %18 : vector<1x64x128xf32> to vector<64x128xf32>
    %cst_23 = arith.constant dense<0.000000e+00> : vector<16x128xf32>
    %20 = tpu.matmul %17, %19, %cst_23 {dimension_numbers = #tpu.dot_dimension_numbers<[1], [0], [0], [1], [0, 0, 1, 1], [], []>} : vector<16x64xf32>, vector<64x128xf32>, vector<16x128xf32> -> vector<16x128xf32>
    %21 = arith.addf %16, %20 : vector<16x128xf32>
    %c0_24 = arith.constant 0 : index
    %c0_25 = arith.constant 0 : index
    %22 = vector.load %arg3[%c0_24, %c0_25] : memref<1x128xf32, #tpu.memory_space<vmem>>, vector<1x128xf32>
    %23 = vector.broadcast %22 : vector<1x128xf32> to vector<16x128xf32>
    %24 = arith.addf %21, %23 : vector<16x128xf32>
    %c0_26 = arith.constant 0 : index
    %c0_27 = arith.constant 0 : index
    %c0_28 = arith.constant 0 : index
    %25 = vector.load %arg4[%c0_26, %c0_27, %c0_28] : memref<1x16x128xf32, #tpu.memory_space<vmem>>, vector<1x16x128xf32>
    %26 = vector.shape_cast %25 : vector<1x16x128xf32> to vector<16x128xf32>
    %27 = vector.shape_cast %24 : vector<16x128xf32> to vector<1x16x128xf32>
    tpu.vector_store %arg4[%c0_26, %c0_27, %c0_28], %27 {strides = array<i32>} : memref<1x16x128xf32, #tpu.memory_space<vmem>>, vector<1x16x128xf32>,
    return
  }
  func.func @transform_0(%arg0: i32) -> (i32, i32, i32) {
    %c0_i32 = arith.constant 0 : i32
    %c0_i32_0 = arith.constant 0 : i32
    %c0_i32_1 = arith.constant 0 : i32
    return %arg0, %c0_i32, %c0_i32_0 : i32, i32, i32
  }
  func.func @transform_1(%arg0: i32) -> (i32, i32, i32) {
    %c0_i32 = arith.constant 0 : i32
    %c0_i32_0 = arith.constant 0 : i32
    %c0_i32_1 = arith.constant 0 : i32
    %c0_i32_2 = arith.constant 0 : i32
    return %c0_i32, %c0_i32_0, %c0_i32_1 : i32, i32, i32
  }
  func.func @transform_2(%arg0: i32) -> (i32, i32) {
    %c0_i32 = arith.constant 0 : i32
    %c0_i32_0 = arith.constant 0 : i32
    %c0_i32_1 = arith.constant 0 : i32
    return %c0_i32, %c0_i32_0 : i32, i32
  }
  func.func @transform_3(%arg0: i32) -> (i32, i32, i32) {
    %c0_i32 = arith.constant 0 : i32
    %c0_i32_0 = arith.constant 0 : i32
    %c0_i32_1 = arith.constant 0 : i32
    return %arg0, %c0_i32, %c0_i32_0 : i32, i32, i32
  }
}

</mosaic_0001>

<llo_original>
// kernel: tile.8
$region0: #{tile.8}
  #allocation0 [shape = 's32[1]{0}', space=sflag, size = 0x4, scoped, tag = 'scoped memory for tile.8']
  %s0 = inlined_call_operand.vmem [shape: f32[8], index: 0, kind: input, shape index: {}]
  %s1 = inlined_call_operand.vmem [shape: f32[16,8], index: 1, kind: output, shape index: {}]
  // Predicated region
  $region2: #{tile.8} parent=0 // pred_check
    _
  $region3: #{tile.8} parent=0 // pred_check_branch
    %3 = sbr.rel (0) target = $region5
  $region4: #{tile.8} parent=0 // pred_region
    _
  $region5: #{tile.8} parent=0 // pred_fallthru
    _
  %v4 = vld [vmem:[%s0] ss:$0 sm:$0xff]
  %5 = vst [vmem:[%s1] sm:$0xff] %v4
  %s6 = scalar_lea.vmem %s1, 8
  %7 = vst [vmem:[%s6] sm:$0xff] %v4

// kernel: tile.9
$region0: #{tile.9}
  %s0 = inlined_call_operand.vmem [shape: f32[16,8], index: 0, kind: input, shape index: {}]
  %s1 = inlined_call_operand.vmem [shape: f32[1,128], index: 1, kind: output, shape index: {}]
  $region1: #{tile.9} parent=0
    #allocation0 [shape = 'u8[4096]{0}', space=vmem, size = 0x1000, scoped, tag = 'scoped mem for output reshape']
    %v2 = vld [vmem:[%s0] sm:$0x1]
    %vm3 = vcmask 64512
    %4 = vst.msk [vmem:[#allocation0] sm:$0x1] %vm3, %v2
    %s5 = scalar_lea.vmem %s0, 15
    %v6 = vld [vmem:[%s5] sm:$0x1]
    %7 = vrot.lane.b32.xlu0 %v6, 120
    %v8 = vpop.permute.xlu0 %7
    %vm9 = vcmask 1048512
    %10 = vst.msk [vmem:[#allocation0] sm:$0x1] %vm9, %v8
    %s11 = scalar_lea.vmem %s0, 14
    %v12 = vld [vmem:[%s11] sm:$0x1]
    %13 = vrot.lane.b32.xlu0 %v12, 112
    %v14 = vpop.permute.xlu0 %13
    %vm15 = vcmask 982912
    %16 = vst.msk [vmem:[#allocation0] sm:$0x1] %vm15, %v14
    %s17 = scalar_lea.vmem %s0, 13
    %v18 = vld [vmem:[%s17] sm:$0x1]
    %19 = vrot.lane.b32.xlu0 %v18, 104
    %v20 = vpop.permute.xlu0 %19
    %vm21 = vcmask 917312
    %22 = vst.msk [vmem:[#allocation0] sm:$0x1] %vm21, %v20
    %s23 = scalar_lea.vmem %s0, 12
    %v24 = vld [vmem:[%s23] sm:$0x1]
    %25 = vrot.lane.b32.xlu0 %v24, 96
    %v26 = vpop.permute.xlu0 %25
    %vm27 = vcmask 851712
    %28 = vst.msk [vmem:[#allocation0] sm:$0x1] %vm27, %v26
    %s29 = scalar_lea.vmem %s0, 11
    %v30 = vld [vmem:[%s29] sm:$0x1]
    %31 = vrot.lane.b32.xlu0 %v30, 88
    %v32 = vpop.permute.xlu0 %31
    %vm33 = vcmask 786112
    %34 = vst.msk [vmem:[#allocation0] sm:$0x1] %vm33, %v32
    %s35 = scalar_lea.vmem %s0, 10
    %v36 = vld [vmem:[%s35] sm:$0x1]
    %37 = vrot.lane.b32.xlu0 %v36, 80
    %v38 = vpop.permute.xlu0 %37
    %vm39 = vcmask 720512
    %40 = vst.msk [vmem:[#allocation0] sm:$0x1] %vm39, %v38
    %s41 = scalar_lea.vmem %s0, 9
    %v42 = vld [vmem:[%s41] sm:$0x1]
    %43 = vrot.lane.b32.xlu0 %v42, 72
    %v44 = vpop.permute.xlu0 %43
    %vm45 = vcmask 654912
    %46 = vst.msk [vmem:[#allocation0] sm:$0x1] %vm45, %v44
    %s47 = scalar_lea.vmem %s0, 8
    %v48 = vld [vmem:[%s47] sm:$0x1]
    %49 = vrot.lane.b32.xlu0 %v48, 64
    %v50 = vpop.permute.xlu0 %49
    %vm51 = vcmask 589312
    %52 = vst.msk [vmem:[#allocation0] sm:$0x1] %vm51, %v50
    %s53 = scalar_lea.vmem %s0, 7
    %v54 = vld [vmem:[%s53] sm:$0x1]
    %55 = vrot.lane.b32.xlu0 %v54, 56
    %v56 = vpop.permute.xlu0 %55
    %vm57 = vcmask 523712
    %58 = vst.msk [vmem:[#allocation0] sm:$0x1] %vm57, %v56
    %s59 = scalar_lea.vmem %s0, 6
    %v60 = vld [vmem:[%s59] sm:$0x1]
    %61 = vrot.lane.b32.xlu0 %v60, 48
    %v62 = vpop.permute.xlu0 %61
    %vm63 = vcmask 458112
    %64 = vst.msk [vmem:[#allocation0] sm:$0x1] %vm63, %v62
    %s65 = scalar_lea.vmem %s0, 5
    %v66 = vld [vmem:[%s65] sm:$0x1]
    %67 = vrot.lane.b32.xlu0 %v66, 40
    %v68 = vpop.permute.xlu0 %67
    %vm69 = vcmask 392512
    %70 = vst.msk [vmem:[#allocation0] sm:$0x1] %vm69, %v68
    %s71 = scalar_lea.vmem %s0, 4
    %v72 = vld [vmem:[%s71] sm:$0x1]
    %73 = vrot.lane.b32.xlu0 %v72, 32
    %v74 = vpop.permute.xlu0 %73
    %vm75 = vcmask 326912
    %76 = vst.msk [vmem:[#allocation0] sm:$0x1] %vm75, %v74
    %s77 = scalar_lea.vmem %s0, 3
    %v78 = vld [vmem:[%s77] sm:$0x1]
    %79 = vrot.lane.b32.xlu0 %v78, 24
    %v80 = vpop.permute.xlu0 %79
    %vm81 = vcmask 261312
    %82 = vst.msk [vmem:[#allocation0] sm:$0x1] %vm81, %v80
    %s83 = scalar_lea.vmem %s0, 2
    %v84 = vld [vmem:[%s83] sm:$0x1]
    %85 = vrot.lane.b32.xlu0 %v84, 16
    %v86 = vpop.permute.xlu0 %85
    %vm87 = vcmask 195712
    %88 = vst.msk [vmem:[#allocation0] sm:$0x1] %vm87, %v86
    %s89 = scalar_lea.vmem %s0, 1
    %v90 = vld [vmem:[%s89] sm:$0x1]
    %91 = vrot.lane.b32.xlu0 %v90, 8
    %v92 = vpop.permute.xlu0 %91
    %vm93 = vcmask 130112
    %94 = vst.msk [vmem:[#allocation0] sm:$0x1] %vm93, %v92
    %s96 = sshll.u32 1, 1
    %s97 = ssub.s32 %s96, 1
    %v99 = vld [vmem:[#allocation0] sm:%s97]
    %s100 = sshll.u32 1, 1
    %s101 = ssub.s32 %s100, 1
    %102 = vst [vmem:[%s1] sm:%s101] %v99

// kernel: sp_conv_transpose2d.1
$region0: #{sp_conv_transpose2d.1}
  #allocation0 [shape = 'u32[]', space=smem, size = 0x4, offset = 0x4, fixed_abs, tag = 'smem constant byte address 0x4 - core index']
  #allocation1 [shape = 'u32[144,128]{1,0:T(1,128)}', space=vmem, size = 0x12000, scoped, tag = 'internal scratch']
  #allocation2 [shape = 'f32[18,64]{1,0:T(8,128)}', space=vmem, size = 0x3000, scoped, tag = 'scratch operand']
  %s0 = inlined_call_operand.vmem [shape: f32[2,16,64], index: 0, kind: input, shape index: {}]
  %s1 = inlined_call_operand.vmem [shape: f32[3,64,128], index: 1, kind: input, shape index: {}]
  %s2 = inlined_call_operand.vmem [shape: f32[1,128], index: 2, kind: input, shape index: {}]
  %s3 = inlined_call_operand.vmem [shape: f32[2,16,128], index: 3, kind: output, shape index: {}]
  %s4 = sld [smem:[#allocation0]]
  $region45: #{sp_conv_transpose2d.1} parent=0
    _
  %s6 = ssub.s32 1, %s4
  %s7 = scalar_select 0, %s6, %s4
  loop: start=0, step=1, limit=4
  $region2: #{sp_conv_transpose2d.1} parent=0 // loop_pre_header
    _
  $region3: #{sp_conv_transpose2d.1} parent=0 // loop_header
    %s9 = sphi 0, %s13
    %p10 = scmp.ge.s32.totalorder %s9, 4
    %s19 = sphi 0, %s21
    %s22 = sphi 0, %s19
    %s23 = sphi 0, %s22
    %s39 = sphi 0, %s23
    %s43 = sphi 0, %s43
    %s45 = sphi 0, %s43
    %s46 = sphi 0, %s45
    %s60 = sphi 0, %s46
    %s64 = sphi 0, %s64
    %s66 = sphi 0, %s64
    %s67 = sphi 0, %s66
    %s81 = sphi 0, %s67
    %s87 = sphi 0, %s89
    %s90 = sphi 0, %s87
    %s91 = sphi 0, %s90
    %s107 = sphi 0, %s91
  $region4: #{sp_conv_transpose2d.1} parent=0 // loop_header_branch
    %12 = sbr.rel (%p10) target = $region8
  $region5: #{sp_conv_transpose2d.1} parent=0 // loop_body
    %s14 = ssub.s32 %s9, 1
    %s15 = ssub.s32 %s9, 2
    %s16 = sadd.s32 %s9, 1
    %s17 = ssub.s32 %s9, %s16
    %p18 = scmp.eq.s32.totalorder %s17, 0
    %s20 = sadd.s32 %s19, 1
    %s21 = scalar_select %p18, %s19, %s20
    %p24 = pneg %p18
    %p25 = scmp.eq.s32.totalorder %s9, 1
    %p26 = por %p24, %p25
    %p27 = scmp.ne.s32.totalorder %s19, %s22
    %p28 = scmp.eq.s32.totalorder %s9, 0
    %p29 = por %p27, %p28
    %p30 = scmp.ne.s32.totalorder %s19, %s22
    %p31 = scmp.eq.s32.totalorder %s14, 1
    %p32 = por %p30, %p31
    %p33 = scmp.ne.s32.totalorder %s22, %s23
    %p34 = scmp.eq.s32.totalorder %s14, 0
    %p35 = por %p33, %p34
    %p36 = scmp.ne.s32.totalorder %s22, %s23
    %p37 = scmp.eq.s32.totalorder %s15, 1
    %p38 = por %p36, %p37
    %p40 = scmp.ne.s32.totalorder %s23, %s39
    %p41 = scmp.eq.s32.totalorder %s15, 0
    %p42 = por %p40, %p41
    %s44 = sadd.s32 %s43, 1
    %p47 = scmp.eq.s32.totalorder %s9, 1
    %p48 = scmp.ne.s32.totalorder %s43, %s45
    %p49 = scmp.eq.s32.totalorder %s9, 0
    %p50 = por %p48, %p49
    %p51 = scmp.ne.s32.totalorder %s43, %s45
    %p52 = scmp.eq.s32.totalorder %s14, 1
    %p53 = por %p51, %p52
    %p54 = scmp.ne.s32.totalorder %s45, %s46
    %p55 = scmp.eq.s32.totalorder %s14, 0
    %p56 = por %p54, %p55
    %p57 = scmp.ne.s32.totalorder %s45, %s46
    %p58 = scmp.eq.s32.totalorder %s15, 1
    %p59 = por %p57, %p58
    %p61 = scmp.ne.s32.totalorder %s46, %s60
    %p62 = scmp.eq.s32.totalorder %s15, 0
    %p63 = por %p61, %p62
    %s65 = sadd.s32 %s64, 1
    %p68 = scmp.eq.s32.totalorder %s9, 1
    %p69 = scmp.ne.s32.totalorder %s64, %s66
    %p70 = scmp.eq.s32.totalorder %s9, 0
    %p71 = por %p69, %p70
    %p72 = scmp.ne.s32.totalorder %s64, %s66
    %p73 = scmp.eq.s32.totalorder %s14, 1
    %p74 = por %p72, %p73
    %p75 = scmp.ne.s32.totalorder %s66, %s67
    %p76 = scmp.eq.s32.totalorder %s14, 0
    %p77 = por %p75, %p76
    %p78 = scmp.ne.s32.totalorder %s66, %s67
    %p79 = scmp.eq.s32.totalorder %s15, 1
    %p80 = por %p78, %p79
    %p82 = scmp.ne.s32.totalorder %s67, %s81
    %p83 = scmp.eq.s32.totalorder %s15, 0
    %p84 = por %p82, %p83
    %s85 = ssub.s32 %s9, %s16
    %p86 = scmp.eq.s32.totalorder %s85, 0
    %s88 = sadd.s32 %s87, 1
    %s89 = scalar_select %p86, %s87, %s88
    %p92 = pneg %p86
    %p93 = scmp.eq.s32.totalorder %s9, 1
    %p94 = por %p92, %p93
    %p95 = scmp.ne.s32.totalorder %s87, %s90
    %p96 = scmp.eq.s32.totalorder %s9, 0
    %p97 = por %p95, %p96
    %p98 = scmp.ne.s32.totalorder %s87, %s90
    %p99 = scmp.eq.s32.totalorder %s14, 1
    %p100 = por %p98, %p99
    %p101 = scmp.ne.s32.totalorder %s90, %s91
    %p102 = scmp.eq.s32.totalorder %s14, 0
    %p103 = por %p101, %p102
    %p104 = scmp.ne.s32.totalorder %s90, %s91
    %p105 = scmp.eq.s32.totalorder %s15, 1
    %p106 = por %p104, %p105
    %p108 = scmp.ne.s32.totalorder %s91, %s107
    %p109 = scmp.eq.s32.totalorder %s15, 0
    %p110 = por %p108, %p109
    %p111 = scmp.le.s32.totalorder 1, %s9
    %p112 = scmp.lt.s32.totalorder %s9, 3
    %p113 = pnand %p111, %p112
    %p114 = pneg %p113
    // Predicated region
    $region9: #{sp_conv_transpose2d.1} parent=5 // pred_check
      _
    $region10: #{sp_conv_transpose2d.1} parent=5 // pred_check_branch
      %116 = sbr.rel (%p113) target = $region12
    $region11: #{sp_conv_transpose2d.1} parent=5 // pred_region
      %s117 = ssub.s32 %s9, 1
      // Predicated region
      $region13: #{sp_conv_transpose2d.1} parent=11 // pred_check
        %p118 = pneg %p56
      $region14: #{sp_conv_transpose2d.1} parent=11 // pred_check_branch
        %120 = sbr.rel (%p118) target = $region16
      $region15: #{sp_conv_transpose2d.1} parent=11 // pred_region
        _
      $region16: #{sp_conv_transpose2d.1} parent=11 // pred_fallthru
        _
      // Predicated region
      $region17: #{sp_conv_transpose2d.1} parent=11 // pred_check
        %p121 = pneg %p77
      $region18: #{sp_conv_transpose2d.1} parent=11 // pred_check_branch
        %123 = sbr.rel (%p121) target = $region20
      $region19: #{sp_conv_transpose2d.1} parent=11 // pred_region
        _
      $region20: #{sp_conv_transpose2d.1} parent=11 // pred_fallthru
        _
    $region12: #{sp_conv_transpose2d.1} parent=5 // pred_fallthru
      _
    %p124 = scmp.lt.s32.totalorder %s9, 2
    // Predicated region
    $region21: #{sp_conv_transpose2d.1} parent=5 // pred_check
      %p125 = pneg %p124
    $region22: #{sp_conv_transpose2d.1} parent=5 // pred_check_branch
      %127 = sbr.rel (%p125) target = $region24
    $region23: #{sp_conv_transpose2d.1} parent=5 // pred_region
      // Predicated region
      $region25: #{sp_conv_transpose2d.1} parent=23 // pred_check
        %p128 = pneg %p29
      $region26: #{sp_conv_transpose2d.1} parent=23 // pred_check_branch
        %130 = sbr.rel (%p128) target = $region28
      $region27: #{sp_conv_transpose2d.1} parent=23 // pred_region
        %p131 = scmp.lt.s32.totalorder %s9, 1
        %s132 = scalar_select %p131, %s9, 1
        %s133 = smul.addr %s132, 2
        %s134 = smul.addr %s133, 8
        %s135 = scalar_lea.vmem %s0, %s134
      $region28: #{sp_conv_transpose2d.1} parent=23 // pred_fallthru
        _
    $region24: #{sp_conv_transpose2d.1} parent=5 // pred_fallthru
      _
    %p136 = scmp.le.s32.totalorder 1, %s9
    %p137 = scmp.lt.s32.totalorder %s9, 3
    %p138 = pnand %p136, %p137
    %p139 = pneg %p138
    // Predicated region
    $region29: #{sp_conv_transpose2d.1} parent=5 // pred_check
      _
    $region30: #{sp_conv_transpose2d.1} parent=5 // pred_check_branch
      %141 = sbr.rel (%p138) target = $region32
    $region31: #{sp_conv_transpose2d.1} parent=5 // pred_region
      %s142 = ssub.s32 %s9, 1
      %p143 = scmp.lt.s32.totalorder %s14, 1
      %s144 = scalar_select %p143, %s14, 1
      %s145 = smul.addr %s144, 2
      %s146 = smul.addr %s145, 8
      %s147 = scalar_lea.vmem %s0, %s146
      %p148 = pneg %p35
      %p149 = pneg %p32
      %p150 = pneg %p56
      %p151 = pneg %p53
      %p152 = pneg %p77
      %p153 = pneg %p74
      %p154 = pneg %p103
      %p155 = pneg %p100
      %p156 = scmp.lt.s32.totalorder %s14, 1
      %s157 = scalar_select %p156, %s14, 1
      %s158 = smul.addr %s157, 2
      %s159 = smul.addr %s158, 8
      %s160 = scalar_lea.vmem %s3, %s159
      %p161 = scmp.lt.s32.totalorder %s14, 1
      %s162 = scalar_select %p161, %s14, 1
      %s163 = smul.addr %s162, 2
      %s164 = smul.addr %s163, 8
      %s165 = scalar_lea.vmem %s0, %s164
      %p166 = scmp.lt.s32.totalorder %s14, 1
      %s167 = scalar_select %p166, %s14, 1
      %s168 = smul.addr %s167, 2
      %s169 = smul.addr %s168, 8
      %s170 = scalar_lea.vmem %s3, %s169
      %vm171 = vcmask 516096
      %172 = vst.msk [vmem:[#allocation2] sm:$0x1] %vm171, 0.0
      %173 = vst.msk [vmem:[#allocation2 + $0x11] sm:$0x1] %vm171, 0.0
      %v174 = vld [vmem:[%s165] sm:$0xff]
      %v175 = vld [vmem:[%s165 + $0x8] sm:$0xff]
      %vm176 = vcmask 523264
      %177 = vst.msk [vmem:[#allocation2 + $0x1] sm:$0xff] %vm176, %v174
      %178 = vst.msk [vmem:[#allocation2 + $0x9] sm:$0xff] %vm176, %v175
      %v179 = vld [vmem:[#allocation2] sm:$0xff]
      %v180 = vld [vmem:[#allocation2 + $0x8] sm:$0xff]
      %v181 = vld [vmem:[%s1] sm:$0xff]
      %v182 = vld [vmem:[%s1 + $0x8] sm:$0xff]
      %v183 = vld [vmem:[%s1 + $0x10] sm:$0xff]
      %v184 = vld [vmem:[%s1 + $0x18] sm:$0xff]
      %v185 = vld [vmem:[%s1 + $0x20] sm:$0xff]
      %v186 = vld [vmem:[%s1 + $0x28] sm:$0xff]
      %v187 = vld [vmem:[%s1 + $0x30] sm:$0xff]
      %v188 = vld [vmem:[%s1 + $0x38] sm:$0xff]
      %v189 = vld [vmem:[#allocation2 + $0x1] sm:$0xff]
      %v190 = vld [vmem:[#allocation2 + $0x9] sm:$0xff]
      %s191 = scalar_lea.vmem %s1, 64
      %v192 = vld [vmem:[%s191] sm:$0xff]
      %v193 = vld [vmem:[%s191 + $0x8] sm:$0xff]
      %v194 = vld [vmem:[%s191 + $0x10] sm:$0xff]
      %v195 = vld [vmem:[%s191 + $0x18] sm:$0xff]
      %v196 = vld [vmem:[%s191 + $0x20] sm:$0xff]
      %v197 = vld [vmem:[%s191 + $0x28] sm:$0xff]
      %v198 = vld [vmem:[%s191 + $0x30] sm:$0xff]
      %v199 = vld [vmem:[%s191 + $0x38] sm:$0xff]
      %v201 = vsel %vm176, %v189, 0
      %v204 = vsel %vm176, %v190, 0
      %206 = vmatprep.subr.mxu0 0.0
      %207 = vmatpush1.msra.mxu0 0.0
      %208 = vmatprep.subr.mxu0 0.0
      %209 = vmatpush1.msra.mxu0 0.0
      %210 = vmatprep.subr.mxu0 0.0
      %211 = vmatpush1.msra.mxu0 0.0
      %212 = vmatprep.subr.mxu0 0.0
      %213 = vmatpush1.msra.mxu0 0.0
      %214 = vmatprep.subr.mxu0 0.0
      %215 = vmatpush1.msra.mxu0 0.0
      %216 = vmatprep.subr.mxu0 0.0
      %217 = vmatpush1.msra.mxu0 0.0
      %218 = vmatprep.subr.mxu0 0.0
      %219 = vmatpush1.msra.mxu0 0.0
      %220 = vmatprep.subr.mxu0 0.0
      %221 = vmatpush1.msra.mxu0 0.0
      %222 = vmatprep.subr.mxu0 0.0
      %223 = vmatpush1.msra.mxu0 %v199
      %224 = vmatprep.subr.mxu0 0.0
      %225 = vmatpush1.msra.mxu0 %v198
      %226 = vmatprep.subr.mxu0 0.0
      %227 = vmatpush1.msra.mxu0 %v197
      %228 = vmatprep.subr.mxu0 0.0
      %229 = vmatpush1.msra.mxu0 %v196
      %230 = vmatprep.subr.mxu0 0.0
      %231 = vmatpush1.msra.mxu0 %v195
      %232 = vmatprep.subr.mxu0 0.0
      %233 = vmatpush1.msra.mxu0 %v194
      %234 = vmatprep.subr.mxu0 0.0
      %235 = vmatpush1.msra.mxu0 %v193
      %236 = vmatprep.subr.mxu0 0.0
      %237 = vmatpush1.msra.mxu0 %v192
      %238 = vmatprep.subr.mxu0 0.0
      %239 = vmatpush2.msra.mxu0 0.0
      %240 = vmatprep.subr.mxu0 0.0
      %241 = vmatpush2.msra.mxu0 0.0
      %242 = vmatprep.subr.mxu0 0.0
      %243 = vmatpush2.msra.mxu0 0.0
      %244 = vmatprep.subr.mxu0 0.0
      %245 = vmatpush2.msra.mxu0 0.0
      %246 = vmatprep.subr.mxu0 0.0
      %247 = vmatpush2.msra.mxu0 0.0
      %248 = vmatprep.subr.mxu0 0.0
      %249 = vmatpush2.msra.mxu0 0.0
      %250 = vmatprep.subr.mxu0 0.0
      %251 = vmatpush2.msra.mxu0 0.0
      %252 = vmatprep.subr.mxu0 0.0
      %253 = vmatpush2.msra.mxu0 0.0
      %254 = vmatprep.subr.mxu0 0.0
      %255 = vmatpush2.msra.mxu0 0.0
      %256 = vmatprep.subr.mxu0 0.0
      %257 = vmatpush2.msra.mxu0 0.0
      %258 = vmatprep.subr.mxu0 0.0
      %259 = vmatpush2.msra.mxu0 0.0
      %260 = vmatprep.subr.mxu0 0.0
      %261 = vmatpush2.msra.mxu0 0.0
      %262 = vmatprep.subr.mxu0 0.0
      %263 = vmatpush2.msra.mxu0 0.0
      %264 = vmatprep.subr.mxu0 0.0
      %265 = vmatpush2.msra.mxu0 0.0
      %266 = vmatprep.subr.mxu0 0.0
      %267 = vmatpush2.msra.mxu0 0.0
      %268 = vmatprep.subr.mxu0 0.0
      %269 = vmatpush2.msra.mxu0 0.0
      %270 = vmatprep.mubr.f32.mxu0 0.0
      %271 = vmatmul.mubr.f32.gmra.mxu0 %v201
      %v272 = vpop.f32.mrf.mxu0
      %v273 = vadd.f32 0.0, %v272
      %v274 = vpop.f32.mrf.mxu0
      %275 = vmatprep.mubr.f32.mxu0 0.0
      %276 = vmatmul.mubr.f32.gmra.mxu0 %v204
      %v277 = vpop.f32.mrf.mxu0
      %v278 = vadd.f32 0.0, %v277
      %v279 = vpop.f32.mrf.mxu0
      %280 = vdwg.mxu0
      %v282 = vsel %vm176, %v179, 0
      %v285 = vsel %vm176, %v180, 0
      %287 = vmatprep.subr.mxu0 0.0
      %288 = vmatpush1.msra.mxu0 0.0
      %289 = vmatprep.subr.mxu0 0.0
      %290 = vmatpush1.msra.mxu0 0.0
      %291 = vmatprep.subr.mxu0 0.0
      %292 = vmatpush1.msra.mxu0 0.0
      %293 = vmatprep.subr.mxu0 0.0
      %294 = vmatpush1.msra.mxu0 0.0
      %295 = vmatprep.subr.mxu0 0.0
      %296 = vmatpush1.msra.mxu0 0.0
      %297 = vmatprep.subr.mxu0 0.0
      %298 = vmatpush1.msra.mxu0 0.0
      %299 = vmatprep.subr.mxu0 0.0
      %300 = vmatpush1.msra.mxu0 0.0
      %301 = vmatprep.subr.mxu0 0.0
      %302 = vmatpush1.msra.mxu0 0.0
      %303 = vmatprep.subr.mxu0 0.0
      %304 = vmatpush1.msra.mxu0 %v188
      %305 = vmatprep.subr.mxu0 0.0
      %306 = vmatpush1.msra.mxu0 %v187
      %307 = vmatprep.subr.mxu0 0.0
      %308 = vmatpush1.msra.mxu0 %v186
      %309 = vmatprep.subr.mxu0 0.0
      %310 = vmatpush1.msra.mxu0 %v185
      %311 = vmatprep.subr.mxu0 0.0
      %312 = vmatpush1.msra.mxu0 %v184
      %313 = vmatprep.subr.mxu0 0.0
      %314 = vmatpush1.msra.mxu0 %v183
      %315 = vmatprep.subr.mxu0 0.0
      %316 = vmatpush1.msra.mxu0 %v182
      %317 = vmatprep.subr.mxu0 0.0
      %318 = vmatpush1.msra.mxu0 %v181
      %319 = vmatprep.subr.mxu0 0.0
      %320 = vmatpush2.msra.mxu0 0.0
      %321 = vmatprep.subr.mxu0 0.0
      %322 = vmatpush2.msra.mxu0 0.0
      %323 = vmatprep.subr.mxu0 0.0
      %324 = vmatpush2.msra.mxu0 0.0
      %325 = vmatprep.subr.mxu0 0.0
      %326 = vmatpush2.msra.mxu0 0.0
      %327 = vmatprep.subr.mxu0 0.0
      %328 = vmatpush2.msra.mxu0 0.0
      %329 = vmatprep.subr.mxu0 0.0
      %330 = vmatpush2.msra.mxu0 0.0
      %331 = vmatprep.subr.mxu0 0.0
      %332 = vmatpush2.msra.mxu0 0.0
      %333 = vmatprep.subr.mxu0 0.0
      %334 = vmatpush2.msra.mxu0 0.0
      %335 = vmatprep.subr.mxu0 0.0
      %336 = vmatpush2.msra.mxu0 0.0
      %337 = vmatprep.subr.mxu0 0.0
      %338 = vmatpush2.msra.mxu0 0.0
      %339 = vmatprep.subr.mxu0 0.0
      %340 = vmatpush2.msra.mxu0 0.0
      %341 = vmatprep.subr.mxu0 0.0
      %342 = vmatpush2.msra.mxu0 0.0
      %343 = vmatprep.subr.mxu0 0.0
      %344 = vmatpush2.msra.mxu0 0.0
      %345 = vmatprep.subr.mxu0 0.0
      %346 = vmatpush2.msra.mxu0 0.0
      %347 = vmatprep.subr.mxu0 0.0
      %348 = vmatpush2.msra.mxu0 0.0
      %349 = vmatprep.subr.mxu0 0.0
      %350 = vmatpush2.msra.mxu0 0.0
      %351 = vmatprep.mubr.f32.mxu0 0.0
      %352 = vmatmul.mubr.f32.gmra.mxu0 %v282
      %v353 = vpop.f32.mrf.mxu0
      %v354 = vadd.f32 %v273, %v353
      %v355 = vpop.f32.mrf.mxu0
      %356 = vmatprep.mubr.f32.mxu0 0.0
      %357 = vmatmul.mubr.f32.gmra.mxu0 %v285
      %v358 = vpop.f32.mrf.mxu0
      %v359 = vadd.f32 %v278, %v358
      %v360 = vpop.f32.mrf.mxu0
      %361 = vdwg.mxu0
      %v362 = vld [vmem:[#allocation2 + $0x2] sm:$0xff]
      %v363 = vld [vmem:[#allocation2 + $0xa] sm:$0xff]
      %s364 = scalar_lea.vmem %s1, 128
      %v365 = vld [vmem:[%s364] sm:$0xff]
      %v366 = vld [vmem:[%s364 + $0x8] sm:$0xff]
      %v367 = vld [vmem:[%s364 + $0x10] sm:$0xff]
      %v368 = vld [vmem:[%s364 + $0x18] sm:$0xff]
      %v369 = vld [vmem:[%s364 + $0x20] sm:$0xff]
      %v370 = vld [vmem:[%s364 + $0x28] sm:$0xff]
      %v371 = vld [vmem:[%s364 + $0x30] sm:$0xff]
      %v372 = vld [vmem:[%s364 + $0x38] sm:$0xff]
      %v374 = vsel %vm176, %v362, 0
      %v377 = vsel %vm176, %v363, 0
      %379 = vmatprep.subr.mxu0 0.0
      %380 = vmatpush1.msra.mxu0 0.0
      %381 = vmatprep.subr.mxu0 0.0
      %382 = vmatpush1.msra.mxu0 0.0
      %383 = vmatprep.subr.mxu0 0.0
      %384 = vmatpush1.msra.mxu0 0.0
      %385 = vmatprep.subr.mxu0 0.0
      %386 = vmatpush1.msra.mxu0 0.0
      %387 = vmatprep.subr.mxu0 0.0
      %388 = vmatpush1.msra.mxu0 0.0
      %389 = vmatprep.subr.mxu0 0.0
      %390 = vmatpush1.msra.mxu0 0.0
      %391 = vmatprep.subr.mxu0 0.0
      %392 = vmatpush1.msra.mxu0 0.0
      %393 = vmatprep.subr.mxu0 0.0
      %394 = vmatpush1.msra.mxu0 0.0
      %395 = vmatprep.subr.mxu0 0.0
      %396 = vmatpush1.msra.mxu0 %v372
      %397 = vmatprep.subr.mxu0 0.0
      %398 = vmatpush1.msra.mxu0 %v371
      %399 = vmatprep.subr.mxu0 0.0
      %400 = vmatpush1.msra.mxu0 %v370
      %401 = vmatprep.subr.mxu0 0.0
      %402 = vmatpush1.msra.mxu0 %v369
      %403 = vmatprep.subr.mxu0 0.0
      %404 = vmatpush1.msra.mxu0 %v368
      %405 = vmatprep.subr.mxu0 0.0
      %406 = vmatpush1.msra.mxu0 %v367
      %407 = vmatprep.subr.mxu0 0.0
      %408 = vmatpush1.msra.mxu0 %v366
      %409 = vmatprep.subr.mxu0 0.0
      %410 = vmatpush1.msra.mxu0 %v365
      %411 = vmatprep.subr.mxu0 0.0
      %412 = vmatpush2.msra.mxu0 0.0
      %413 = vmatprep.subr.mxu0 0.0
      %414 = vmatpush2.msra.mxu0 0.0
      %415 = vmatprep.subr.mxu0 0.0
      %416 = vmatpush2.msra.mxu0 0.0
      %417 = vmatprep.subr.mxu0 0.0
      %418 = vmatpush2.msra.mxu0 0.0
      %419 = vmatprep.subr.mxu0 0.0
      %420 = vmatpush2.msra.mxu0 0.0
      %421 = vmatprep.subr.mxu0 0.0
      %422 = vmatpush2.msra.mxu0 0.0
      %423 = vmatprep.subr.mxu0 0.0
      %424 = vmatpush2.msra.mxu0 0.0
      %425 = vmatprep.subr.mxu0 0.0
      %426 = vmatpush2.msra.mxu0 0.0
      %427 = vmatprep.subr.mxu0 0.0
      %428 = vmatpush2.msra.mxu0 0.0
      %429 = vmatprep.subr.mxu0 0.0
      %430 = vmatpush2.msra.mxu0 0.0
      %431 = vmatprep.subr.mxu0 0.0
      %432 = vmatpush2.msra.mxu0 0.0
      %433 = vmatprep.subr.mxu0 0.0
      %434 = vmatpush2.msra.mxu0 0.0
      %435 = vmatprep.subr.mxu0 0.0
      %436 = vmatpush2.msra.mxu0 0.0
      %437 = vmatprep.subr.mxu0 0.0
      %438 = vmatpush2.msra.mxu0 0.0
      %439 = vmatprep.subr.mxu0 0.0
      %440 = vmatpush2.msra.mxu0 0.0
      %441 = vmatprep.subr.mxu0 0.0
      %442 = vmatpush2.msra.mxu0 0.0
      %443 = vmatprep.mubr.f32.mxu0 0.0
      %444 = vmatmul.mubr.f32.gmra.mxu0 %v374
      %v445 = vpop.f32.mrf.mxu0
      %v446 = vadd.f32 0.0, %v445
      %v447 = vpop.f32.mrf.mxu0
      %448 = vmatprep.mubr.f32.mxu0 0.0
      %449 = vmatmul.mubr.f32.gmra.mxu0 %v377
      %v450 = vpop.f32.mrf.mxu0
      %v451 = vadd.f32 0.0, %v450
      %v452 = vpop.f32.mrf.mxu0
      %453 = vdwg.mxu0
      %v454 = vadd.f32 %v354, %v446
      %v455 = vadd.f32 %v359, %v451
      %v456 = vld [vmem:[%s2] sm:$0x1]
      %v458 = vlaneseq
      %v459 = vshrl.u32 %v458, 7
      %v460 = vsub.s32 0, %v459
      %v461 = vrot.slane %v456, %v460
      %v463 = vadd.f32 %v454, %v461
      %v464 = vadd.f32 %v455, %v461
      %465 = vst [vmem:[%s170] sm:$0xff] %v463
      %466 = vst [vmem:[%s170 + $0x8] sm:$0xff] %v464
      %p467 = scmp.lt.s32.totalorder %s14, 1
      %s468 = scalar_select %p467, %s14, 1
      %s469 = smul.addr %s468, 2
      %s470 = smul.addr %s469, 8
      %s471 = scalar_lea.vmem %s3, %s470
      // Predicated region
      $region33: #{sp_conv_transpose2d.1} parent=31 // pred_check
        %p472 = pneg %p100
      $region34: #{sp_conv_transpose2d.1} parent=31 // pred_check_branch
        %474 = sbr.rel (%p472) target = $region36
      $region35: #{sp_conv_transpose2d.1} parent=31 // pred_region
        _
      $region36: #{sp_conv_transpose2d.1} parent=31 // pred_fallthru
        _
    $region32: #{sp_conv_transpose2d.1} parent=5 // pred_fallthru
      _
    %p475 = scmp.le.s32.totalorder 2, %s9
    // Predicated region
    $region37: #{sp_conv_transpose2d.1} parent=5 // pred_check
      %p476 = pneg %p475
    $region38: #{sp_conv_transpose2d.1} parent=5 // pred_check_branch
      %478 = sbr.rel (%p476) target = $region40
    $region39: #{sp_conv_transpose2d.1} parent=5 // pred_region
      %s479 = ssub.s32 %s9, 2
      // Predicated region
      $region41: #{sp_conv_transpose2d.1} parent=39 // pred_check
        %p480 = pneg %p106
      $region42: #{sp_conv_transpose2d.1} parent=39 // pred_check_branch
        %482 = sbr.rel (%p480) target = $region44
      $region43: #{sp_conv_transpose2d.1} parent=39 // pred_region
        %p483 = scmp.lt.s32.totalorder %s15, 1
        %s484 = scalar_select %p483, %s15, 1
        %s485 = smul.addr %s484, 2
        %s486 = smul.addr %s485, 8
        %s487 = scalar_lea.vmem %s3, %s486
      $region44: #{sp_conv_transpose2d.1} parent=39 // pred_fallthru
        _
    $region40: #{sp_conv_transpose2d.1} parent=5 // pred_fallthru
      _
  $region6: #{sp_conv_transpose2d.1} parent=0 // loop_footer
    %s13 = sadd.s32 1, %s9
  $region7: #{sp_conv_transpose2d.1} parent=0 // loop_footer_branch
    %8 = sbr.rel target = $region3
  $region8: #{sp_conv_transpose2d.1} parent=0 // loop_exit
    _

</llo_original>
